<compile_context>
chip_gen: v6e
topology: v6e:2x2x1
jax: 0.10.0
libtpu: 0.0.40
codegen_flags: <defaults>
</compile_context>

<pallas_src>
import jax
import jax.numpy as jnp
from jax import lax
from jax.experimental import pallas as pl
from jax.experimental.pallas import tpu as pltpu

K = 9          # conv1 kernel size
PAD = 4        # conv1 padding
BN_EPS = 1e-5


def _round_up(v, m):
    return (v + m - 1) // m * m


def _pick_tile(L):
    # largest lane-aligned tile that divides L; fall back to full L (single tile)
    for tl in (512, 256, 128):
        if L % tl == 0:
            return tl
    return L


def conv_block_kernel(x_ref, lh_ref, rh_ref, w1_ref, s1_ref, b1_ref,
                      w2_ref, s2_ref, b2_ref, out_ref, xh_ref):
    # x_ref:  (1, Cin, TL)        current aligned sequence tile (f32)
    # lh_ref: (1, 1, Cin, PAD)    left halo of this tile (zeros at sequence start)
    # rh_ref: (1, 1, Cin, PAD)    right halo of this tile (zeros at sequence end)
    # w1_ref: (H, K*Cin_p)        conv1 weight, tap-major, bf16
    # s1/b1:  (H, 1)              folded BN1 scale / bias (f32)
    # w2_ref: (Cout, H)           1x1 conv weight, bf16
    # s2/b2:  (Cout, 1)           folded BN2 scale / bias (f32)
    # out_ref:(1, Cout, TL)
    # xh_ref: (Cin_p, TL + 2*PAD) VMEM scratch for the halo'd window (f32)
    cin = x_ref.shape[1]
    tl = out_ref.shape[2]
    cin_p = xh_ref.shape[0]

    x_int = x_ref[0]                                     # (Cin, TL) f32

    # ---- stitch padded window [tile_start - PAD, tile_start + TL + PAD) ----
    xh_ref[:cin, :PAD] = lh_ref[0, 0]
    xh_ref[:cin, PAD:PAD + tl] = x_int
    xh_ref[:cin, PAD + tl:] = rh_ref[0, 0]
    if cin_p > cin:                                      # zero channel-pad rows
        xh_ref[cin:, :] = jnp.zeros((cin_p - cin, tl + 2 * PAD), jnp.float32)

    xh = xh_ref[...]                                     # (Cin_p, TL + 2*PAD)

    # ---- Conv1d(k=9): one deep MXU matmul over the stacked taps ----
    stacked = jnp.concatenate([xh[:, t:t + tl] for t in range(K)], axis=0)
    stacked = stacked.astype(jnp.bfloat16)               # (K*Cin_p, TL)
    h = jnp.dot(w1_ref[...], stacked,
                preferred_element_type=jnp.float32)      # (H, TL) f32

    # ---- BatchNorm1d (folded, inference) + SiLU (f32) ----
    h = h * s1_ref[...] + b1_ref[...]
    h = h * jax.nn.sigmoid(h)

    # ---- Conv1d(1x1) + BatchNorm1d (folded) ----
    y = jnp.dot(w2_ref[...], h.astype(jnp.bfloat16),
                preferred_element_type=jnp.float32)      # (Cout, TL) f32
    y = y * s2_ref[...] + b2_ref[...]

    # ---- residual (f32, aligned tile) ----
    out_ref[0] = (x_int + y).astype(out_ref.dtype)


def conv_block(x, w1, s1, b1, w2, s2, b2, *, tile_l=None):
    """x: (N, C, L) f32; w1: (H, C, K); w2: (C, H, 1); s*/b*: folded BN scale/bias.
    Returns x + conv(x)."""
    N, Cin, L = x.shape
    H = w1.shape[0]
    Cout = w2.shape[0]
    assert w1.shape == (H, Cin, K)
    assert Cin == Cout, "residual requires inp == oup"

    TL = _pick_tile(L) if tile_l is None else tile_l
    assert L % TL == 0 and TL >= PAD
    Lt = L // TL
    CIN_P = _round_up(Cin, 8)          # aligned sublane stacking of the K taps

    # conv1 weight -> (H, K*Cin_p) bf16; column t*Cin_p + c <-> (tap t, channel c)
    w1f = jnp.transpose(w1, (0, 2, 1))                           # (H, K, Cin)
    if CIN_P != Cin:
        w1f = jnp.pad(w1f, ((0, 0), (0, 0), (0, CIN_P - Cin)))
    w1f = w1f.reshape(H, K * CIN_P).astype(jnp.bfloat16)
    w2f = w2[:, :, 0].astype(jnp.bfloat16)                       # (Cout, H)

    # tiny per-tile halo slabs instead of a full padded copy of x in HBM
    xb = x.reshape(N, Cin, Lt, TL)
    zh = jnp.zeros((N, Cin, 1, PAD), x.dtype)
    lhalo = jnp.concatenate([zh, xb[:, :, :-1, TL - PAD:]], axis=2)
    rhalo = jnp.concatenate([xb[:, :, 1:, :PAD], zh], axis=2)
    lhalo = jnp.transpose(lhalo, (0, 2, 1, 3))                   # (N, Lt, Cin, PAD)
    rhalo = jnp.transpose(rhalo, (0, 2, 1, 3))                   # (N, Lt, Cin, PAD)

    grid = (N, Lt)
    return pl.pallas_call(
        conv_block_kernel,
        out_shape=jax.ShapeDtypeStruct((N, Cout, L), x.dtype),
        grid_spec=pltpu.PrefetchScalarGridSpec(
            num_scalar_prefetch=0,
            grid=grid,
            in_specs=[
                pl.BlockSpec((1, Cin, TL), lambda n, j: (n, 0, j)),        # x tile
                pl.BlockSpec((1, 1, Cin, PAD), lambda n, j: (n, j, 0, 0)),  # left halo
                pl.BlockSpec((1, 1, Cin, PAD), lambda n, j: (n, j, 0, 0)),  # right halo
                pl.BlockSpec((H, K * CIN_P), lambda n, j: (0, 0)),          # w1 (bf16)
                pl.BlockSpec((H, 1), lambda n, j: (0, 0)),                  # s1
                pl.BlockSpec((H, 1), lambda n, j: (0, 0)),                  # b1
                pl.BlockSpec((Cout, H), lambda n, j: (0, 0)),               # w2 (bf16)
                pl.BlockSpec((Cout, 1), lambda n, j: (0, 0)),               # s2
                pl.BlockSpec((Cout, 1), lambda n, j: (0, 0)),               # b2
            ],
            out_specs=pl.BlockSpec((1, Cout, TL), lambda n, j: (n, 0, j)),
            scratch_shapes=[pltpu.VMEM((CIN_P, TL + 2 * PAD), jnp.float32)],
        ),
        compiler_params=pltpu.CompilerParams(
            dimension_semantics=("parallel", "parallel")),
    )(x, lhalo, rhalo, w1f, s1, b1, w2f, s2, b2)


def reference_f32(x, w1, s1, b1, w2, s2, b2):
    """Pure-JAX full-f32 reference (semantic check)."""
    h = lax.conv_general_dilated(
        x, w1, window_strides=(1,), padding=[(PAD, PAD)],
        dimension_numbers=("NCH", "OIH", "NCH"))
    h = h * s1[None] + b1[None]
    h = h * jax.nn.sigmoid(h)
    y = jnp.einsum("oh,nhl->nol", w2[:, :, 0], h)
    y = y * s2[None] + b2[None]
    return x + y


def reference_bf16(x, w1, s1, b1, w2, s2, b2):
    """Reference that mirrors the kernel numerics: bf16 matmul inputs, f32 accum."""
    f32 = jnp.float32
    xb = x.astype(jnp.bfloat16).astype(f32)
    w1b = w1.astype(jnp.bfloat16).astype(f32)
    h = lax.conv_general_dilated(
        xb, w1b, window_strides=(1,), padding=[(PAD, PAD)],
        dimension_numbers=("NCH", "OIH", "NCH"))
    h = h * s1[None] + b1[None]
    h = h * jax.nn.sigmoid(h)
    hb = h.astype(jnp.bfloat16).astype(f32)
    w2b = w2[:, :, 0].astype(jnp.bfloat16).astype(f32)
    y = jnp.einsum("oh,nhl->nol", w2b, hb)
    y = y * s2[None] + b2[None]
    return x + y


if __name__ == "__main__":
    # small shapes consistent with the module: batch=2, inp=oup=4, L=16, expand=2 -> hidden=8
    N, C, L = 2, 4, 16
    H = round(C * 2)

    key = jax.random.PRNGKey(0)
    ks = jax.random.split(key, 7)

    x = jax.random.normal(ks[0], (N, C, L), dtype=jnp.float32)

    # Conv weights (PyTorch shapes: conv1 (H, C, K), conv2 (C, H, 1))
    w1_torch = jax.random.normal(ks[1], (H, C, K), dtype=jnp.float32) * 0.2
    w2_torch = jax.random.normal(ks[2], (C, H, 1), dtype=jnp.float32) * 0.2

    # BatchNorm params (deterministic random gamma/beta; fresh running stats)
    gamma1 = jax.random.normal(ks[3], (H,), dtype=jnp.float32) * 0.1 + 1.0
    beta1 = jax.random.normal(ks[4], (H,), dtype=jnp.float32) * 0.1
    gamma2 = jax.random.normal(ks[5], (C,), dtype=jnp.float32) * 0.1 + 1.0
    beta2 = jax.random.normal(ks[6], (C,), dtype=jnp.float32) * 0.1
    rmean1 = jnp.zeros((H,), jnp.float32); rvar1 = jnp.ones((H,), jnp.float32)
    rmean2 = jnp.zeros((C,), jnp.float32); rvar2 = jnp.ones((C,), jnp.float32)

    # Fold BN (inference mode) into per-channel scale/bias
    s1 = (gamma1 / jnp.sqrt(rvar1 + BN_EPS)).reshape(H, 1)
    b1 = (beta1 - rmean1 * gamma1 / jnp.sqrt(rvar1 + BN_EPS)).reshape(H, 1)
    s2 = (gamma2 / jnp.sqrt(rvar2 + BN_EPS)).reshape(C, 1)
    b2 = (beta2 - rmean2 * gamma2 / jnp.sqrt(rvar2 + BN_EPS)).reshape(C, 1)

    out = conv_block(x, w1_torch, s1, b1, w2_torch, s2, b2)
    out = jax.block_until_ready(out)

    ref_match = reference_bf16(x, w1_torch, s1, b1, w2_torch, s2, b2)
    ref_full = reference_f32(x, w1_torch, s1, b1, w2_torch, s2, b2)

    assert out.shape == (N, C, L)
    # structural check (same bf16-input / f32-accum numerics as the kernel)
    assert jnp.allclose(out, ref_match, atol=5e-3, rtol=5e-3)
    # semantic check vs. full-f32 module math (bf16 matmul inputs lose mantissa bits)
    assert jnp.allclose(out, ref_full, atol=5e-2, rtol=5e-2)

    print("KERNEL_OK")
</pallas_src>

<mosaic_0001>
module attributes {stable_mosaic.version = 11 : i64} {
  func.func @conv_block_kernel(%arg0: i32, %arg1: i32, %arg2: memref<1x4x16xf32, #tpu.memory_space<vmem>>, %arg3: memref<1x1x4x4xf32, #tpu.memory_space<vmem>>, %arg4: memref<1x1x4x4xf32, #tpu.memory_space<vmem>>, %arg5: memref<8x72xbf16, #tpu.memory_space<vmem>>, %arg6: memref<8x1xf32, #tpu.memory_space<vmem>>, %arg7: memref<8x1xf32, #tpu.memory_space<vmem>>, %arg8: memref<4x8xbf16, #tpu.memory_space<vmem>>, %arg9: memref<4x1xf32, #tpu.memory_space<vmem>>, %arg10: memref<4x1xf32, #tpu.memory_space<vmem>>, %arg11: memref<1x4x16xf32, #tpu.memory_space<vmem>>, %arg12: memref<8x24xf32, #tpu.memory_space<vmem>>) attributes {dimension_semantics = [#tpu.dimension_semantics<parallel>, #tpu.dimension_semantics<parallel>], iteration_bounds = array<i64: 2, 1>, scalar_prefetch = 0 : i64, scratch_operands = 1 : i64, tpu.core_type = #tpu.core_type<tc>, window_params = [{transform_indices = @transform_0, window_bounds = array<i64: 1, 4, 16>}, {transform_indices = @transform_1, window_bounds = array<i64: 1, 1, 4, 4>}, {transform_indices = @transform_2, window_bounds = array<i64: 1, 1, 4, 4>}, {pipeline_mode = #tpu.pipeline_mode<synchronous>, transform_indices = @transform_3, window_bounds = array<i64: 8, 72>}, {pipeline_mode = #tpu.pipeline_mode<synchronous>, transform_indices = @transform_4, window_bounds = array<i64: 8, 1>}, {pipeline_mode = #tpu.pipeline_mode<synchronous>, transform_indices = @transform_5, window_bounds = array<i64: 8, 1>}, {pipeline_mode = #tpu.pipeline_mode<synchronous>, transform_indices = @transform_6, window_bounds = array<i64: 4, 8>}, {pipeline_mode = #tpu.pipeline_mode<synchronous>, transform_indices = @transform_7, window_bounds = array<i64: 4, 1>}, {pipeline_mode = #tpu.pipeline_mode<synchronous>, transform_indices = @transform_8, window_bounds = array<i64: 4, 1>}, {transform_indices = @transform_9, window_bounds = array<i64: 1, 4, 16>}]} {
    %c0 = arith.constant 0 : index
    %c0_0 = arith.constant 0 : index
    %c0_1 = arith.constant 0 : index
    %0 = vector.load %arg2[%c0, %c0_0, %c0_1] : memref<1x4x16xf32, #tpu.memory_space<vmem>>, vector<1x4x16xf32>
    %1 = vector.shape_cast %0 : vector<1x4x16xf32> to vector<4x16xf32>
    %c0_2 = arith.constant 0 : index
    %c0_3 = arith.constant 0 : index
    %c0_4 = arith.constant 0 : index
    %c0_5 = arith.constant 0 : index
    %2 = vector.load %arg3[%c0_2, %c0_3, %c0_4, %c0_5] : memref<1x1x4x4xf32, #tpu.memory_space<vmem>>, vector<1x1x4x4xf32>
    %3 = vector.shape_cast %2 : vector<1x1x4x4xf32> to vector<4x4xf32>
    %c0_6 = arith.constant 0 : index
    %c0_7 = arith.constant 0 : index
    %4 = vector.load %arg12[%c0_6, %c0_7] : memref<8x24xf32, #tpu.memory_space<vmem>>, vector<4x4xf32>
    tpu.vector_store %arg12[%c0_6, %c0_7], %3 {strides = array<i32>} : memref<8x24xf32, #tpu.memory_space<vmem>>, vector<4x4xf32>,
    %c0_8 = arith.constant 0 : index
    %c4 = arith.constant 4 : index
    %5 = vector.load %arg12[%c0_8, %c4] : memref<8x24xf32, #tpu.memory_space<vmem>>, vector<4x16xf32>
    tpu.vector_store %arg12[%c0_8, %c4], %1 {strides = array<i32>} : memref<8x24xf32, #tpu.memory_space<vmem>>, vector<4x16xf32>,
    %c0_9 = arith.constant 0 : index
    %c0_10 = arith.constant 0 : index
    %c0_11 = arith.constant 0 : index
    %c0_12 = arith.constant 0 : index
    %6 = vector.load %arg4[%c0_9, %c0_10, %c0_11, %c0_12] : memref<1x1x4x4xf32, #tpu.memory_space<vmem>>, vector<1x1x4x4xf32>
    %7 = vector.shape_cast %6 : vector<1x1x4x4xf32> to vector<4x4xf32>
    %c0_13 = arith.constant 0 : index
    %c20 = arith.constant 20 : index
    %8 = vector.load %arg12[%c0_13, %c20] : memref<8x24xf32, #tpu.memory_space<vmem>>, vector<4x4xf32>
    tpu.vector_store %arg12[%c0_13, %c20], %7 {strides = array<i32>} : memref<8x24xf32, #tpu.memory_space<vmem>>, vector<4x4xf32>,
    %cst = arith.constant 0.000000e+00 : f32
    %9 = vector.broadcast %cst : f32 to vector<4x24xf32>
    %c4_14 = arith.constant 4 : index
    %c0_15 = arith.constant 0 : index
    %10 = vector.load %arg12[%c4_14, %c0_15] : memref<8x24xf32, #tpu.memory_space<vmem>>, vector<4x24xf32>
    tpu.vector_store %arg12[%c4_14, %c0_15], %9 {strides = array<i32>} : memref<8x24xf32, #tpu.memory_space<vmem>>, vector<4x24xf32>,
    %c0_16 = arith.constant 0 : index
    %c0_17 = arith.constant 0 : index
    %11 = vector.load %arg12[%c0_16, %c0_17] : memref<8x24xf32, #tpu.memory_space<vmem>>, vector<8x24xf32>
    %12 = vector.extract_strided_slice %11 {offsets = [0, 0], sizes = [8, 16], strides = [1, 1]} : vector<8x24xf32> to vector<8x16xf32>
    %13 = vector.extract_strided_slice %11 {offsets = [0, 1], sizes = [8, 16], strides = [1, 1]} : vector<8x24xf32> to vector<8x16xf32>
    %14 = vector.extract_strided_slice %11 {offsets = [0, 2], sizes = [8, 16], strides = [1, 1]} : vector<8x24xf32> to vector<8x16xf32>
    %15 = vector.extract_strided_slice %11 {offsets = [0, 3], sizes = [8, 16], strides = [1, 1]} : vector<8x24xf32> to vector<8x16xf32>
    %16 = vector.extract_strided_slice %11 {offsets = [0, 4], sizes = [8, 16], strides = [1, 1]} : vector<8x24xf32> to vector<8x16xf32>
    %17 = vector.extract_strided_slice %11 {offsets = [0, 5], sizes = [8, 16], strides = [1, 1]} : vector<8x24xf32> to vector<8x16xf32>
    %18 = vector.extract_strided_slice %11 {offsets = [0, 6], sizes = [8, 16], strides = [1, 1]} : vector<8x24xf32> to vector<8x16xf32>
    %19 = vector.extract_strided_slice %11 {offsets = [0, 7], sizes = [8, 16], strides = [1, 1]} : vector<8x24xf32> to vector<8x16xf32>
    %20 = vector.extract_strided_slice %11 {offsets = [0, 8], sizes = [8, 16], strides = [1, 1]} : vector<8x24xf32> to vector<8x16xf32>
    %21 = tpu.concatenate %12, %13, %14, %15, %16, %17, %18, %19, %20 in 0 : vector<8x16xf32>, vector<8x16xf32>, vector<8x16xf32>, vector<8x16xf32>, vector<8x16xf32>, vector<8x16xf32>, vector<8x16xf32>, vector<8x16xf32>, vector<8x16xf32> -> vector<72x16xf32>
    %22 = arith.truncf %21 : vector<72x16xf32> to vector<72x16xbf16>
    %c0_18 = arith.constant 0 : index
    %c0_19 = arith.constant 0 : index
    %23 = vector.load %arg5[%c0_18, %c0_19] : memref<8x72xbf16, #tpu.memory_space<vmem>>, vector<8x72xbf16>
    %cst_20 = arith.constant dense<0.000000e+00> : vector<8x16xf32>
    %24 = tpu.matmul %23, %22, %cst_20 {dimension_numbers = #tpu.dot_dimension_numbers<[1], [0], [0], [1], [0, 0, 1, 1], [], []>} : vector<8x72xbf16>, vector<72x16xbf16>, vector<8x16xf32> -> vector<8x16xf32>
    %c0_21 = arith.constant 0 : index
    %c0_22 = arith.constant 0 : index
    %25 = vector.load %arg6[%c0_21, %c0_22] : memref<8x1xf32, #tpu.memory_space<vmem>>, vector<8x1xf32>
    %26 = vector.broadcast %25 : vector<8x1xf32> to vector<8x16xf32>
    %27 = arith.mulf %24, %26 : vector<8x16xf32>
    %c0_23 = arith.constant 0 : index
    %c0_24 = arith.constant 0 : index
    %28 = vector.load %arg7[%c0_23, %c0_24] : memref<8x1xf32, #tpu.memory_space<vmem>>, vector<8x1xf32>
    %29 = vector.broadcast %28 : vector<8x1xf32> to vector<8x16xf32>
    %30 = arith.addf %27, %29 : vector<8x16xf32>
    %31 = arith.negf %30 : vector<8x16xf32>
    %32 = math.exp %31 : vector<8x16xf32>
    %cst_25 = arith.constant 1.000000e+00 : f32
    %33 = vector.broadcast %cst_25 : f32 to vector<8x16xf32>
    %34 = arith.addf %33, %32 : vector<8x16xf32>
    %35 = arith.divf %33, %34 : vector<8x16xf32>
    %36 = arith.mulf %30, %35 : vector<8x16xf32>
    %c0_26 = arith.constant 0 : index
    %c0_27 = arith.constant 0 : index
    %37 = vector.load %arg8[%c0_26, %c0_27] : memref<4x8xbf16, #tpu.memory_space<vmem>>, vector<4x8xbf16>
    %38 = arith.truncf %36 : vector<8x16xf32> to vector<8x16xbf16>
    %cst_28 = arith.constant dense<0.000000e+00> : vector<4x16xf32>
    %39 = tpu.matmul %37, %38, %cst_28 {dimension_numbers = #tpu.dot_dimension_numbers<[1], [0], [0], [1], [0, 0, 1, 1], [], []>} : vector<4x8xbf16>, vector<8x16xbf16>, vector<4x16xf32> -> vector<4x16xf32>
    %c0_29 = arith.constant 0 : index
    %c0_30 = arith.constant 0 : index
    %40 = vector.load %arg9[%c0_29, %c0_30] : memref<4x1xf32, #tpu.memory_space<vmem>>, vector<4x1xf32>
    %41 = vector.broadcast %40 : vector<4x1xf32> to vector<4x16xf32>
    %42 = arith.mulf %39, %41 : vector<4x16xf32>
    %c0_31 = arith.constant 0 : index
    %c0_32 = arith.constant 0 : index
    %43 = vector.load %arg10[%c0_31, %c0_32] : memref<4x1xf32, #tpu.memory_space<vmem>>, vector<4x1xf32>
    %44 = vector.broadcast %43 : vector<4x1xf32> to vector<4x16xf32>
    %45 = arith.addf %42, %44 : vector<4x16xf32>
    %46 = arith.addf %1, %45 : vector<4x16xf32>
    %c0_33 = arith.constant 0 : index
    %c0_34 = arith.constant 0 : index
    %c0_35 = arith.constant 0 : index
    %47 = vector.load %arg11[%c0_33, %c0_34, %c0_35] : memref<1x4x16xf32, #tpu.memory_space<vmem>>, vector<1x4x16xf32>
    %48 = vector.shape_cast %47 : vector<1x4x16xf32> to vector<4x16xf32>
    %49 = vector.shape_cast %46 : vector<4x16xf32> to vector<1x4x16xf32>
    tpu.vector_store %arg11[%c0_33, %c0_34, %c0_35], %49 {strides = array<i32>} : memref<1x4x16xf32, #tpu.memory_space<vmem>>, vector<1x4x16xf32>,
    return
  }
  func.func @transform_0(%arg0: i32, %arg1: i32) -> (i32, i32, i32) {
    %c0_i32 = arith.constant 0 : i32
    %c0_i32_0 = arith.constant 0 : i32
    return %arg0, %c0_i32, %arg1 : i32, i32, i32
  }
  func.func @transform_1(%arg0: i32, %arg1: i32) -> (i32, i32, i32, i32) {
    %c0_i32 = arith.constant 0 : i32
    %c0_i32_0 = arith.constant 0 : i32
    %c0_i32_1 = arith.constant 0 : i32
    return %arg0, %arg1, %c0_i32, %c0_i32_0 : i32, i32, i32, i32
  }
  func.func @transform_2(%arg0: i32, %arg1: i32) -> (i32, i32, i32, i32) {
    %c0_i32 = arith.constant 0 : i32
    %c0_i32_0 = arith.constant 0 : i32
    %c0_i32_1 = arith.constant 0 : i32
    return %arg0, %arg1, %c0_i32, %c0_i32_0 : i32, i32, i32, i32
  }
  func.func @transform_3(%arg0: i32, %arg1: i32) -> (i32, i32) {
    %c0_i32 = arith.constant 0 : i32
    %c0_i32_0 = arith.constant 0 : i32
    %c0_i32_1 = arith.constant 0 : i32
    return %c0_i32, %c0_i32_0 : i32, i32
  }
  func.func @transform_4(%arg0: i32, %arg1: i32) -> (i32, i32) {
    %c0_i32 = arith.constant 0 : i32
    %c0_i32_0 = arith.constant 0 : i32
    %c0_i32_1 = arith.constant 0 : i32
    return %c0_i32, %c0_i32_0 : i32, i32
  }
  func.func @transform_5(%arg0: i32, %arg1: i32) -> (i32, i32) {
    %c0_i32 = arith.constant 0 : i32
    %c0_i32_0 = arith.constant 0 : i32
    %c0_i32_1 = arith.constant 0 : i32
    return %c0_i32, %c0_i32_0 : i32, i32
  }
  func.func @transform_6(%arg0: i32, %arg1: i32) -> (i32, i32) {
    %c0_i32 = arith.constant 0 : i32
    %c0_i32_0 = arith.constant 0 : i32
    %c0_i32_1 = arith.constant 0 : i32
    return %c0_i32, %c0_i32_0 : i32, i32
  }
  func.func @transform_7(%arg0: i32, %arg1: i32) -> (i32, i32) {
    %c0_i32 = arith.constant 0 : i32
    %c0_i32_0 = arith.constant 0 : i32
    %c0_i32_1 = arith.constant 0 : i32
    return %c0_i32, %c0_i32_0 : i32, i32
  }
  func.func @transform_8(%arg0: i32, %arg1: i32) -> (i32, i32) {
    %c0_i32 = arith.constant 0 : i32
    %c0_i32_0 = arith.constant 0 : i32
    %c0_i32_1 = arith.constant 0 : i32
    return %c0_i32, %c0_i32_0 : i32, i32
  }
  func.func @transform_9(%arg0: i32, %arg1: i32) -> (i32, i32, i32) {
    %c0_i32 = arith.constant 0 : i32
    %c0_i32_0 = arith.constant 0 : i32
    return %arg0, %c0_i32, %arg1 : i32, i32, i32
  }
}

</mosaic_0001>

<llo_original>
// kernel: tpu_custom_call.1
$region0: #{tpu_custom_call.1}
  #allocation0 [shape = 'u32[]', space=smem, size = 0x4, offset = 0x4, fixed_abs, tag = 'smem constant byte address 0x4 - core index']
  #allocation1 [shape = 'u32[144,128]{1,0:T(1,128)}', space=vmem, size = 0x12000, scoped, tag = 'internal scratch']
  #allocation2 [shape = 'f32[8,24]{1,0:T(8,128)}', space=vmem, size = 0x1000, scoped, tag = 'scratch operand']
  %s0 = inlined_call_operand.vmem [shape: f32[2,4,16], index: 0, kind: input, shape index: {}]
  %s1 = inlined_call_operand.vmem [shape: f32[2,1,4,4], index: 1, kind: input, shape index: {}]
  %s2 = inlined_call_operand.vmem [shape: f32[2,1,4,4], index: 2, kind: input, shape index: {}]
  %s3 = inlined_call_operand.vmem [shape: bf16[8,72], index: 3, kind: input, shape index: {}]
  %s4 = inlined_call_operand.vmem [shape: f32[8,1], index: 4, kind: input, shape index: {}]
  %s5 = inlined_call_operand.vmem [shape: f32[8,1], index: 5, kind: input, shape index: {}]
  %s6 = inlined_call_operand.vmem [shape: bf16[4,8], index: 6, kind: input, shape index: {}]
  %s7 = inlined_call_operand.vmem [shape: f32[4,1], index: 7, kind: input, shape index: {}]
  %s8 = inlined_call_operand.vmem [shape: f32[4,1], index: 8, kind: input, shape index: {}]
  %s9 = inlined_call_operand.hbm [shape: f32[2,4,16], index: 9, kind: output, shape index: {}]
  %s10 = sld [smem:[#allocation0]]
  $region69: #{tpu_custom_call.1} parent=0
    _
  %s12 = ssub.s32 1, %s10
  %s13 = scalar_select 0, %s12, %s10
  $region1: #{tpu_custom_call.1} parent=0
    #allocation3 [shape = 'u8[4096]{0}', space=vmem, size = 0x1000, scoped, tag = 'output window, operand 0']
    #allocation4 [shape = 's32[2]{0}', space=sflag, size = 0x8, scoped, tag = 'scoped memory for tpu_custom_call.1']
    %14 = vsyncpa [#allocation4], 0
    %s15 = scalar_lea.sflag [#allocation4], 1
    %16 = vsyncpa %s15, 0
    loop: start=0, step=1, limit=4
    $region2: #{tpu_custom_call.1} parent=1 // loop_pre_header
      _
    $region3: #{tpu_custom_call.1} parent=1 // loop_header
      %s18 = sphi 0, %s22
      %p19 = scmp.ge.s32.totalorder %s18, 4
      %s25 = sphi 0, %s37
      %s26 = sphi 0, %s33
      %s27 = sphi 0, %s25
      %s28 = sphi 0, %s26
      %s29 = sphi 0, %s27
      %s30 = sphi 0, %s28
      %s42 = sphi 0, %s44
      %s45 = sphi 0, %s42
      %s46 = sphi 0, %s45
      %s62 = sphi 0, %s46
      %s70 = sphi 0, %s72
      %s73 = sphi 0, %s70
      %s74 = sphi 0, %s73
      %s90 = sphi 0, %s74
      %s98 = sphi 0, %s100
      %s101 = sphi 0, %s98
      %s102 = sphi 0, %s101
      %s118 = sphi 0, %s102
      %s122 = sphi 0, %s122
      %s124 = sphi 0, %s122
      %s125 = sphi 0, %s124
      %s139 = sphi 0, %s125
      %s143 = sphi 0, %s143
      %s145 = sphi 0, %s143
      %s146 = sphi 0, %s145
      %s160 = sphi 0, %s146
      %s164 = sphi 0, %s164
      %s166 = sphi 0, %s164
      %s167 = sphi 0, %s166
      %s181 = sphi 0, %s167
      %s185 = sphi 0, %s185
      %s187 = sphi 0, %s185
      %s188 = sphi 0, %s187
      %s202 = sphi 0, %s188
      %s206 = sphi 0, %s206
      %s208 = sphi 0, %s206
      %s209 = sphi 0, %s208
      %s223 = sphi 0, %s209
      %s227 = sphi 0, %s227
      %s229 = sphi 0, %s227
      %s230 = sphi 0, %s229
      %s244 = sphi 0, %s230
      %s252 = sphi 0, %s254
      %s255 = sphi 0, %s252
      %s256 = sphi 0, %s255
      %s272 = sphi 0, %s256
    $region4: #{tpu_custom_call.1} parent=1 // loop_header_branch
      %21 = sbr.rel (%p19) target = $region8
    $region5: #{tpu_custom_call.1} parent=1 // loop_body
      %s23 = ssub.s32 %s18, 1
      %s24 = ssub.s32 %s18, 2
      %s31 = sadd.s32 1, %s26
      %p32 = scmp.ge.s32.totalorder %s31, 1
      %s33 = scalar_select %p32, 0, %s31
      %s34 = sadd.s32 1, %s25
      %s35 = scalar_select %p32, %s34, %s25
      %p36 = scmp.ge.s32.totalorder %s35, 2
      %s37 = scalar_select %p36, 0, %s35
      %s38 = ssub.s32 %s25, %s37
      %s39 = ssub.s32 %s26, %s33
      %s40 = sor.u32 %s38, %s39
      %p41 = scmp.eq.s32.totalorder %s40, 0
      %s43 = sadd.s32 %s42, 1
      %s44 = scalar_select %p41, %s42, %s43
      %p47 = pneg %p41
      %p48 = scmp.eq.s32.totalorder %s18, 1
      %p49 = por %p47, %p48
      %p50 = scmp.ne.s32.totalorder %s42, %s45
      %p51 = scmp.eq.s32.totalorder %s18, 0
      %p52 = por %p50, %p51
      %p53 = scmp.ne.s32.totalorder %s42, %s45
      %p54 = scmp.eq.s32.totalorder %s23, 1
      %p55 = por %p53, %p54
      %p56 = scmp.ne.s32.totalorder %s45, %s46
      %p57 = scmp.eq.s32.totalorder %s23, 0
      %p58 = por %p56, %p57
      %p59 = scmp.ne.s32.totalorder %s45, %s46
      %p60 = scmp.eq.s32.totalorder %s24, 1
      %p61 = por %p59, %p60
      %p63 = scmp.ne.s32.totalorder %s46, %s62
      %p64 = scmp.eq.s32.totalorder %s24, 0
      %p65 = por %p63, %p64
      %s66 = ssub.s32 %s25, %s37
      %s67 = ssub.s32 %s26, %s33
      %s68 = sor.u32 %s66, %s67
      %p69 = scmp.eq.s32.totalorder %s68, 0
      %s71 = sadd.s32 %s70, 1
      %s72 = scalar_select %p69, %s70, %s71
      %p75 = pneg %p69
      %p76 = scmp.eq.s32.totalorder %s18, 1
      %p77 = por %p75, %p76
      %p78 = scmp.ne.s32.totalorder %s70, %s73
      %p79 = scmp.eq.s32.totalorder %s18, 0
      %p80 = por %p78, %p79
      %p81 = scmp.ne.s32.totalorder %s70, %s73
      %p82 = scmp.eq.s32.totalorder %s23, 1
      %p83 = por %p81, %p82
      %p84 = scmp.ne.s32.totalorder %s73, %s74
      %p85 = scmp.eq.s32.totalorder %s23, 0
      %p86 = por %p84, %p85
      %p87 = scmp.ne.s32.totalorder %s73, %s74
      %p88 = scmp.eq.s32.totalorder %s24, 1
      %p89 = por %p87, %p88
      %p91 = scmp.ne.s32.totalorder %s74, %s90
      %p92 = scmp.eq.s32.totalorder %s24, 0
      %p93 = por %p91, %p92
      %s94 = ssub.s32 %s25, %s37
      %s95 = ssub.s32 %s26, %s33
      %s96 = sor.u32 %s94, %s95
      %p97 = scmp.eq.s32.totalorder %s96, 0
      %s99 = sadd.s32 %s98, 1
      %s100 = scalar_select %p97, %s98, %s99
      %p103 = pneg %p97
      %p104 = scmp.eq.s32.totalorder %s18, 1
      %p105 = por %p103, %p104
      %p106 = scmp.ne.s32.totalorder %s98, %s101
      %p107 = scmp.eq.s32.totalorder %s18, 0
      %p108 = por %p106, %p107
      %p109 = scmp.ne.s32.totalorder %s98, %s101
      %p110 = scmp.eq.s32.totalorder %s23, 1
      %p111 = por %p109, %p110
      %p112 = scmp.ne.s32.totalorder %s101, %s102
      %p113 = scmp.eq.s32.totalorder %s23, 0
      %p114 = por %p112, %p113
      %p115 = scmp.ne.s32.totalorder %s101, %s102
      %p116 = scmp.eq.s32.totalorder %s24, 1
      %p117 = por %p115, %p116
      %p119 = scmp.ne.s32.totalorder %s102, %s118
      %p120 = scmp.eq.s32.totalorder %s24, 0
      %p121 = por %p119, %p120
      %s123 = sadd.s32 %s122, 1
      %p126 = scmp.eq.s32.totalorder %s18, 1
      %p127 = scmp.ne.s32.totalorder %s122, %s124
      %p128 = scmp.eq.s32.totalorder %s18, 0
      %p129 = por %p127, %p128
      %p130 = scmp.ne.s32.totalorder %s122, %s124
      %p131 = scmp.eq.s32.totalorder %s23, 1
      %p132 = por %p130, %p131
      %p133 = scmp.ne.s32.totalorder %s124, %s125
      %p134 = scmp.eq.s32.totalorder %s23, 0
      %p135 = por %p133, %p134
      %p136 = scmp.ne.s32.totalorder %s124, %s125
      %p137 = scmp.eq.s32.totalorder %s24, 1
      %p138 = por %p136, %p137
      %p140 = scmp.ne.s32.totalorder %s125, %s139
      %p141 = scmp.eq.s32.totalorder %s24, 0
      %p142 = por %p140, %p141
      %s144 = sadd.s32 %s143, 1
      %p147 = scmp.eq.s32.totalorder %s18, 1
      %p148 = scmp.ne.s32.totalorder %s143, %s145
      %p149 = scmp.eq.s32.totalorder %s18, 0
      %p150 = por %p148, %p149
      %p151 = scmp.ne.s32.totalorder %s143, %s145
      %p152 = scmp.eq.s32.totalorder %s23, 1
      %p153 = por %p151, %p152
      %p154 = scmp.ne.s32.totalorder %s145, %s146
      %p155 = scmp.eq.s32.totalorder %s23, 0
      %p156 = por %p154, %p155
      %p157 = scmp.ne.s32.totalorder %s145, %s146
      %p158 = scmp.eq.s32.totalorder %s24, 1
      %p159 = por %p157, %p158
      %p161 = scmp.ne.s32.totalorder %s146, %s160
      %p162 = scmp.eq.s32.totalorder %s24, 0
      %p163 = por %p161, %p162
      %s165 = sadd.s32 %s164, 1
      %p168 = scmp.eq.s32.totalorder %s18, 1
      %p169 = scmp.ne.s32.totalorder %s164, %s166
      %p170 = scmp.eq.s32.totalorder %s18, 0
      %p171 = por %p169, %p170
      %p172 = scmp.ne.s32.totalorder %s164, %s166
      %p173 = scmp.eq.s32.totalorder %s23, 1
      %p174 = por %p172, %p173
      %p175 = scmp.ne.s32.totalorder %s166, %s167
      %p176 = scmp.eq.s32.totalorder %s23, 0
      %p177 = por %p175, %p176
      %p178 = scmp.ne.s32.totalorder %s166, %s167
      %p179 = scmp.eq.s32.totalorder %s24, 1
      %p180 = por %p178, %p179
      %p182 = scmp.ne.s32.totalorder %s167, %s181
      %p183 = scmp.eq.s32.totalorder %s24, 0
      %p184 = por %p182, %p183
      %s186 = sadd.s32 %s185, 1
      %p189 = scmp.eq.s32.totalorder %s18, 1
      %p190 = scmp.ne.s32.totalorder %s185, %s187
      %p191 = scmp.eq.s32.totalorder %s18, 0
      %p192 = por %p190, %p191
      %p193 = scmp.ne.s32.totalorder %s185, %s187
      %p194 = scmp.eq.s32.totalorder %s23, 1
      %p195 = por %p193, %p194
      %p196 = scmp.ne.s32.totalorder %s187, %s188
      %p197 = scmp.eq.s32.totalorder %s23, 0
      %p198 = por %p196, %p197
      %p199 = scmp.ne.s32.totalorder %s187, %s188
      %p200 = scmp.eq.s32.totalorder %s24, 1
      %p201 = por %p199, %p200
      %p203 = scmp.ne.s32.totalorder %s188, %s202
      %p204 = scmp.eq.s32.totalorder %s24, 0
      %p205 = por %p203, %p204
      %s207 = sadd.s32 %s206, 1
      %p210 = scmp.eq.s32.totalorder %s18, 1
      %p211 = scmp.ne.s32.totalorder %s206, %s208
      %p212 = scmp.eq.s32.totalorder %s18, 0
      %p213 = por %p211, %p212
      %p214 = scmp.ne.s32.totalorder %s206, %s208
      %p215 = scmp.eq.s32.totalorder %s23, 1
      %p216 = por %p214, %p215
      %p217 = scmp.ne.s32.totalorder %s208, %s209
      %p218 = scmp.eq.s32.totalorder %s23, 0
      %p219 = por %p217, %p218
      %p220 = scmp.ne.s32.totalorder %s208, %s209
      %p221 = scmp.eq.s32.totalorder %s24, 1
      %p222 = por %p220, %p221
      %p224 = scmp.ne.s32.totalorder %s209, %s223
      %p225 = scmp.eq.s32.totalorder %s24, 0
      %p226 = por %p224, %p225
      %s228 = sadd.s32 %s227, 1
      %p231 = scmp.eq.s32.totalorder %s18, 1
      %p232 = scmp.ne.s32.totalorder %s227, %s229
      %p233 = scmp.eq.s32.totalorder %s18, 0
      %p234 = por %p232, %p233
      %p235 = scmp.ne.s32.totalorder %s227, %s229
      %p236 = scmp.eq.s32.totalorder %s23, 1
      %p237 = por %p235, %p236
      %p238 = scmp.ne.s32.totalorder %s229, %s230
      %p239 = scmp.eq.s32.totalorder %s23, 0
      %p240 = por %p238, %p239
      %p241 = scmp.ne.s32.totalorder %s229, %s230
      %p242 = scmp.eq.s32.totalorder %s24, 1
      %p243 = por %p241, %p242
      %p245 = scmp.ne.s32.totalorder %s230, %s244
      %p246 = scmp.eq.s32.totalorder %s24, 0
      %p247 = por %p245, %p246
      %s248 = ssub.s32 %s25, %s37
      %s249 = ssub.s32 %s26, %s33
      %s250 = sor.u32 %s248, %s249
      %p251 = scmp.eq.s32.totalorder %s250, 0
      %s253 = sadd.s32 %s252, 1
      %s254 = scalar_select %p251, %s252, %s253
      %p257 = pneg %p251
      %p258 = scmp.eq.s32.totalorder %s18, 1
      %p259 = por %p257, %p258
      %p260 = scmp.ne.s32.totalorder %s252, %s255
      %p261 = scmp.eq.s32.totalorder %s18, 0
      %p262 = por %p260, %p261
      %p263 = scmp.ne.s32.totalorder %s252, %s255
      %p264 = scmp.eq.s32.totalorder %s23, 1
      %p265 = por %p263, %p264
      %p266 = scmp.ne.s32.totalorder %s255, %s256
      %p267 = scmp.eq.s32.totalorder %s23, 0
      %p268 = por %p266, %p267
      %p269 = scmp.ne.s32.totalorder %s255, %s256
      %p270 = scmp.eq.s32.totalorder %s24, 1
      %p271 = por %p269, %p270
      %p273 = scmp.ne.s32.totalorder %s256, %s272
      %p274 = scmp.eq.s32.totalorder %s24, 0
      %p275 = por %p273, %p274
      %p276 = scmp.le.s32.totalorder 1, %s18
      %p277 = scmp.lt.s32.totalorder %s18, 3
      %p278 = pnand %p276, %p277
      %p279 = pneg %p278
      // Predicated region
      $region9: #{tpu_custom_call.1} parent=5 // pred_check
        _
      $region10: #{tpu_custom_call.1} parent=5 // pred_check_branch
        %281 = sbr.rel (%p278) target = $region12
      $region11: #{tpu_custom_call.1} parent=5 // pred_region
        %s282 = ssub.s32 %s18, 1
        // Predicated region
        $region13: #{tpu_custom_call.1} parent=11 // pred_check
          %p283 = pneg %p135
        $region14: #{tpu_custom_call.1} parent=11 // pred_check_branch
          %285 = sbr.rel (%p283) target = $region16
        $region15: #{tpu_custom_call.1} parent=11 // pred_region
          _
        $region16: #{tpu_custom_call.1} parent=11 // pred_fallthru
          _
        // Predicated region
        $region17: #{tpu_custom_call.1} parent=11 // pred_check
          %p286 = pneg %p156
        $region18: #{tpu_custom_call.1} parent=11 // pred_check_branch
          %288 = sbr.rel (%p286) target = $region20
        $region19: #{tpu_custom_call.1} parent=11 // pred_region
          _
        $region20: #{tpu_custom_call.1} parent=11 // pred_fallthru
          _
        // Predicated region
        $region21: #{tpu_custom_call.1} parent=11 // pred_check
          %p289 = pneg %p177
        $region22: #{tpu_custom_call.1} parent=11 // pred_check_branch
          %291 = sbr.rel (%p289) target = $region24
        $region23: #{tpu_custom_call.1} parent=11 // pred_region
          _
        $region24: #{tpu_custom_call.1} parent=11 // pred_fallthru
          _
        // Predicated region
        $region25: #{tpu_custom_call.1} parent=11 // pred_check
          %p292 = pneg %p198
        $region26: #{tpu_custom_call.1} parent=11 // pred_check_branch
          %294 = sbr.rel (%p292) target = $region28
        $region27: #{tpu_custom_call.1} parent=11 // pred_region
          _
        $region28: #{tpu_custom_call.1} parent=11 // pred_fallthru
          _
        // Predicated region
        $region29: #{tpu_custom_call.1} parent=11 // pred_check
          %p295 = pneg %p219
        $region30: #{tpu_custom_call.1} parent=11 // pred_check_branch
          %297 = sbr.rel (%p295) target = $region32
        $region31: #{tpu_custom_call.1} parent=11 // pred_region
          _
        $region32: #{tpu_custom_call.1} parent=11 // pred_fallthru
          _
        // Predicated region
        $region33: #{tpu_custom_call.1} parent=11 // pred_check
          %p298 = pneg %p240
        $region34: #{tpu_custom_call.1} parent=11 // pred_check_branch
          %300 = sbr.rel (%p298) target = $region36
        $region35: #{tpu_custom_call.1} parent=11 // pred_region
          _
        $region36: #{tpu_custom_call.1} parent=11 // pred_fallthru
          _
      $region12: #{tpu_custom_call.1} parent=5 // pred_fallthru
        _
      %p301 = scmp.lt.s32.totalorder %s18, 2
      // Predicated region
      $region37: #{tpu_custom_call.1} parent=5 // pred_check
        %p302 = pneg %p301
      $region38: #{tpu_custom_call.1} parent=5 // pred_check_branch
        %304 = sbr.rel (%p302) target = $region40
      $region39: #{tpu_custom_call.1} parent=5 // pred_region
        // Predicated region
        $region41: #{tpu_custom_call.1} parent=39 // pred_check
          %p305 = pneg %p52
        $region42: #{tpu_custom_call.1} parent=39 // pred_check_branch
          %307 = sbr.rel (%p305) target = $region44
        $region43: #{tpu_custom_call.1} parent=39 // pred_region
          %p308 = scmp.lt.s32.totalorder %s25, 1
          %s309 = scalar_select %p308, %s25, 1
          %p310 = scmp.lt.s32.totalorder %s26, 0
          %s311 = scalar_select %p310, %s26, 0
          %s312 = sadd.s32 %s311, %s309
          %s313 = smul.addr %s312, 4
          %s314 = scalar_lea.vmem %s0, %s313
        $region44: #{tpu_custom_call.1} parent=39 // pred_fallthru
          _
        // Predicated region
        $region45: #{tpu_custom_call.1} parent=39 // pred_check
          %p315 = pneg %p80
        $region46: #{tpu_custom_call.1} parent=39 // pred_check_branch
          %317 = sbr.rel (%p315) target = $region48
        $region47: #{tpu_custom_call.1} parent=39 // pred_region
          %p318 = scmp.lt.s32.totalorder %s25, 1
          %s319 = scalar_select %p318, %s25, 1
          %p320 = scmp.lt.s32.totalorder %s26, 0
          %s321 = scalar_select %p320, %s26, 0
          %s322 = sadd.s32 %s321, %s319
          %s323 = smul.addr %s322, 4
          %s324 = scalar_lea.vmem %s1, %s323
        $region48: #{tpu_custom_call.1} parent=39 // pred_fallthru
          _
        // Predicated region
        $region49: #{tpu_custom_call.1} parent=39 // pred_check
          %p325 = pneg %p108
        $region50: #{tpu_custom_call.1} parent=39 // pred_check_branch
          %327 = sbr.rel (%p325) target = $region52
        $region51: #{tpu_custom_call.1} parent=39 // pred_region
          %p328 = scmp.lt.s32.totalorder %s25, 1
          %s329 = scalar_select %p328, %s25, 1
          %p330 = scmp.lt.s32.totalorder %s26, 0
          %s331 = scalar_select %p330, %s26, 0
          %s332 = sadd.s32 %s331, %s329
          %s333 = smul.addr %s332, 4
          %s334 = scalar_lea.vmem %s2, %s333
        $region52: #{tpu_custom_call.1} parent=39 // pred_fallthru
          _
      $region40: #{tpu_custom_call.1} parent=5 // pred_fallthru
        _
      %p335 = scmp.le.s32.totalorder 1, %s18
      %p336 = scmp.lt.s32.totalorder %s18, 3
      %p337 = pnand %p335, %p336
      %p338 = pneg %p337
      // Predicated region
      $region53: #{tpu_custom_call.1} parent=5 // pred_check
        _
      $region54: #{tpu_custom_call.1} parent=5 // pred_check_branch
        %340 = sbr.rel (%p337) target = $region56
      $region55: #{tpu_custom_call.1} parent=5 // pred_region
        %s341 = ssub.s32 %s18, 1
        %p342 = scmp.lt.s32.totalorder %s27, 1
        %s343 = scalar_select %p342, %s27, 1
        %p344 = scmp.lt.s32.totalorder %s28, 0
        %s345 = scalar_select %p344, %s28, 0
        %s346 = sadd.s32 %s345, %s343
        %s347 = smul.addr %s346, 4
        %s348 = scalar_lea.vmem %s0, %s347
        %p349 = pneg %p58
        %p350 = pneg %p55
        %p351 = scmp.lt.s32.totalorder %s27, 1
        %s352 = scalar_select %p351, %s27, 1
        %p353 = scmp.lt.s32.totalorder %s28, 0
        %s354 = scalar_select %p353, %s28, 0
        %s355 = sadd.s32 %s354, %s352
        %s356 = smul.addr %s355, 4
        %s357 = scalar_lea.vmem %s1, %s356
        %p358 = pneg %p86
        %p359 = pneg %p83
        %p360 = scmp.lt.s32.totalorder %s27, 1
        %s361 = scalar_select %p360, %s27, 1
        %p362 = scmp.lt.s32.totalorder %s28, 0
        %s363 = scalar_select %p362, %s28, 0
        %s364 = sadd.s32 %s363, %s361
        %s365 = smul.addr %s364, 4
        %s366 = scalar_lea.vmem %s2, %s365
        %p367 = pneg %p114
        %p368 = pneg %p111
        %p369 = pneg %p135
        %p370 = pneg %p132
        %p371 = pneg %p156
        %p372 = pneg %p153
        %p373 = pneg %p177
        %p374 = pneg %p174
        %p375 = pneg %p198
        %p376 = pneg %p195
        %p377 = pneg %p219
        %p378 = pneg %p216
        %p379 = pneg %p240
        %p380 = pneg %p237
        %p381 = pneg %p268
        %p382 = pneg %p265
        %s383 = sand.u32 %s255, 1
        %s384 = scalar_lea.sflag [#allocation4], %s383
        %s385 = sand.u32 %s255, 1
        %s386 = smul.addr %s385, 4
        %s387 = scalar_lea.vmem [#allocation3], %s386
        %p388 = scmp.lt.s32.totalorder %s27, 1
        %s389 = scalar_select %p388, %s27, 1
        %p390 = scmp.lt.s32.totalorder %s28, 0
        %s391 = scalar_select %p390, %s28, 0
        %s392 = sadd.s32 %s391, %s389
        %s393 = smul.addr %s392, 4
        %s394 = scalar_lea.vmem %s0, %s393
        %p395 = scmp.lt.s32.totalorder %s27, 1
        %s396 = scalar_select %p395, %s27, 1
        %p397 = scmp.lt.s32.totalorder %s28, 0
        %s398 = scalar_select %p397, %s28, 0
        %s399 = sadd.s32 %s398, %s396
        %s400 = smul.addr %s399, 4
        %s401 = scalar_lea.vmem %s1, %s400
        %p402 = scmp.lt.s32.totalorder %s27, 1
        %s403 = scalar_select %p402, %s27, 1
        %p404 = scmp.lt.s32.totalorder %s28, 0
        %s405 = scalar_select %p404, %s28, 0
        %s406 = sadd.s32 %s405, %s403
        %s407 = smul.addr %s406, 4
        %s408 = scalar_lea.vmem %s2, %s407
        %v410 = vld [vmem:[%s394] sm:$0xf]
        %v411 = vld [vmem:[%s401] sm:$0xf]
        %vm412 = vcmask 27648
        %413 = vst.msk [vmem:[#allocation2] sm:$0xf] %vm412, %v411
        %415 = vrot.lane.b32.xlu0 %v410, 4
        %v416 = vpop.permute.xlu0 %415
        %vm418 = vcmask 158752
        %419 = vst.msk [vmem:[#allocation2] sm:$0xf] %vm418, %v416
        %v420 = vld [vmem:[%s408] sm:$0xf]
        %422 = vrot.lane.b32.xlu0 %v420, 20
        %v423 = vpop.permute.xlu0 %422
        %vm425 = vcmask 191648
        %426 = vst.msk [vmem:[#allocation2] sm:$0xf] %vm425, %v423
        %vm427 = vcmask 191488
        %428 = vst.msk [vmem:[#allocation2 + $0x4] sm:$0xf] %vm427, 0.0
        %v429 = vld [vmem:[#allocation2] sm:$0xff]
        %431 = vrot.lane.b32.xlu0 %v429, 127
        %v432 = vpop.permute.xlu0 %431
        %434 = vrot.lane.b32.xlu0 %v429, 126
        %v435 = vpop.permute.xlu0 %434
        %437 = vrot.lane.b32.xlu0 %v429, 125
        %v438 = vpop.permute.xlu0 %437
        %440 = vrot.lane.b32.xlu0 %v429, 124
        %v441 = vpop.permute.xlu0 %440
        %443 = vrot.lane.b32.xlu0 %v429, 123
        %v444 = vpop.permute.xlu0 %443
        %446 = vrot.lane.b32.xlu0 %v429, 122
        %v447 = vpop.permute.xlu0 %446
        %449 = vrot.lane.b32.xlu0 %v429, 121
        %v450 = vpop.permute.xlu0 %449
        %452 = vrot.lane.b32.xlu0 %v429, 120
        %v453 = vpop.permute.xlu0 %452
        %v455 = vpack.c.bf16 %v432, %v429
        %v456 = vpack.c.bf16 %v438, %v435
        %v457 = vpack.c.bf16 %v444, %v441
        %v458 = vpack.c.bf16 %v450, %v447
        %v459 = vpack.c.bf16 %v453, %v453
        %v460 = vld [vmem:[%s3] sm:$0xf]
        %vm461 = vcmask 588800
        %v463 = vsel %vm461, %v460, 0
        %vm465 = vcmask 1043456
        %v467 = vsel %vm465, %v459, 0
        %469 = vmatprep.subr.bf16.mxu0 0
        %470 = vmatpush1.bf16.msra.mxu0 0
        %471 = vmatprep.subr.bf16.mxu0 0
        %472 = vmatpush1.bf16.msra.mxu0 0
        %473 = vmatprep.subr.bf16.mxu0 0
        %474 = vmatpush1.bf16.msra.mxu0 0
        %475 = vmatprep.subr.bf16.mxu0 0
        %476 = vmatpush1.bf16.msra.mxu0 %v467
        %477 = vmatprep.subr.bf16.mxu0 0
        %478 = vmatpush1.bf16.msra.mxu0 %v458
        %479 = vmatprep.subr.bf16.mxu0 0
        %480 = vmatpush1.bf16.msra.mxu0 %v457
        %481 = vmatprep.subr.bf16.mxu0 0
        %482 = vmatpush1.bf16.msra.mxu0 %v456
        %483 = vmatprep.subr.bf16.mxu0 0
        %484 = vmatpush1.bf16.msra.mxu0 %v455
        %485 = vmatprep.subr.bf16.mxu0 0
        %486 = vmatpush2.bf16.msra.mxu0 0
        %487 = vmatprep.subr.bf16.mxu0 0
        %488 = vmatpush2.bf16.msra.mxu0 0
        %489 = vmatprep.subr.bf16.mxu0 0
        %490 = vmatpush2.bf16.msra.mxu0 0
        %491 = vmatprep.subr.bf16.mxu0 0
        %492 = vmatpush2.bf16.msra.mxu0 0
        %493 = vmatprep.subr.bf16.mxu0 0
        %494 = vmatpush2.bf16.msra.mxu0 0
        %495 = vmatprep.subr.bf16.mxu0 0
        %496 = vmatpush2.bf16.msra.mxu0 0
        %497 = vmatprep.subr.bf16.mxu0 0
        %498 = vmatpush2.bf16.msra.mxu0 0
        %499 = vmatprep.subr.bf16.mxu0 0
        %500 = vmatpush2.bf16.msra.mxu0 0
        %501 = vmatprep.mubr.bf16.mxu0 0
        %502 = vmatmul.mubr.bf16.gmra.mxu0 %v463
        %v503 = vpop.f32.mrf.mxu0
        %v504 = vadd.f32 0.0, %v503
        %v505 = vpop.f32.mrf.mxu0
        %v506 = vpop.f32.mrf.mxu0
        %v507 = vpop.f32.mrf.mxu0
        %508 = vdwg.mxu0
        %v509 = vld [vmem:[%s4] sm:$0xff]
        %511 = vset.pattern.permute.xlu0 0
        %512 = vperm.xlu0 %511, %v509
        %v513 = vpop.permute.xlu0 %512
        %v515 = vmul.f32 %v504, %v513
        %v516 = vld [vmem:[%s5] sm:$0xff]
        %518 = vset.pattern.permute.xlu0 0
        %519 = vperm.xlu0 %518, %v516
        %v520 = vpop.permute.xlu0 %519
        %v522 = vadd.f32 %v515, %v520
        %v523 = vxor.u32 %v522, 2147483648
        %v524 = vmul.f32 %v523, 1.442695
        %v525 = vpow.pop %v524
        %v526 = vadd.f32 %v525, 1.0
        %v527 = vrcp.pop %v526
        %v528 = vmul.f32 1.0, %v527
        %v529 = vmul.f32 %v522, %v528
        %v530 = vld [vmem:[%s6] sm:$0x3]
        %v531 = vpack.c.bf16 %v529, %v529
        %vm532 = vcmask 64512
        %v534 = vsel %vm532, %v530, 0
        %v537 = vsel %vm465, %v531, 0
        %539 = vmatprep.subr.bf16.mxu0 0
        %540 = vmatpush1.bf16.msra.mxu0 0
        %541 = vmatprep.subr.bf16.mxu0 0
        %542 = vmatpush1.bf16.msra.mxu0 0
        %543 = vmatprep.subr.bf16.mxu0 0
        %544 = vmatpush1.bf16.msra.mxu0 0
        %545 = vmatprep.subr.bf16.mxu0 0
        %546 = vmatpush1.bf16.msra.mxu0 0
        %547 = vmatprep.subr.bf16.mxu0 0
        %548 = vmatpush1.bf16.msra.mxu0 0
        %549 = vmatprep.subr.bf16.mxu0 0
        %550 = vmatpush1.bf16.msra.mxu0 0
        %551 = vmatprep.subr.bf16.mxu0 0
        %552 = vmatpush1.bf16.msra.mxu0 0
        %553 = vmatprep.subr.bf16.mxu0 0
        %554 = vmatpush1.bf16.msra.mxu0 %v537
        %555 = vmatprep.subr.bf16.mxu0 0
        %556 = vmatpush2.bf16.msra.mxu0 0
        %557 = vmatprep.subr.bf16.mxu0 0
        %558 = vmatpush2.bf16.msra.mxu0 0
        %559 = vmatprep.subr.bf16.mxu0 0
        %560 = vmatpush2.bf16.msra.mxu0 0
        %561 = vmatprep.subr.bf16.mxu0 0
        %562 = vmatpush2.bf16.msra.mxu0 0
        %563 = vmatprep.subr.bf16.mxu0 0
        %564 = vmatpush2.bf16.msra.mxu0 0
        %565 = vmatprep.subr.bf16.mxu0 0
        %566 = vmatpush2.bf16.msra.mxu0 0
        %567 = vmatprep.subr.bf16.mxu0 0
        %568 = vmatpush2.bf16.msra.mxu0 0
        %569 = vmatprep.subr.bf16.mxu0 0
        %570 = vmatpush2.bf16.msra.mxu0 0
        %571 = vmatprep.mubr.bf16.mxu0 0
        %572 = vmatmul.mubr.bf16.gmra.mxu0 %v534
        %v573 = vpop.f32.mrf.mxu0
        %v574 = vadd.f32 0.0, %v573
        %v575 = vpop.f32.mrf.mxu0
        %v576 = vpop.f32.mrf.mxu0
        %v577 = vpop.f32.mrf.mxu0
        %578 = vdwg.mxu0
        %v579 = vld [vmem:[%s7] sm:$0xf]
        %581 = vset.pattern.permute.xlu0 0
        %582 = vperm.xlu0 %581, %v579
        %v583 = vpop.permute.xlu0 %582
        %v585 = vmul.f32 %v574, %v583
        %v586 = vld [vmem:[%s8] sm:$0xf]
        %588 = vset.pattern.permute.xlu0 0
        %589 = vperm.xlu0 %588, %v586
        %v590 = vpop.permute.xlu0 %589
        %v592 = vadd.f32 %v585, %v590
        %v593 = vadd.f32 %v410, %v592
        %vm594 = vcmask 125952
        %595 = vst.msk [vmem:[%s387] sm:$0xf] %vm594, %v593
        %s596 = sand.u32 %s255, 1
        %s597 = scalar_lea.sflag [#allocation4], %s596
        %s598 = sand.u32 %s255, 1
        %s599 = smul.addr %s598, 4
        %s600 = scalar_lea.vmem [#allocation3], %s599
        // Predicated region
        $region57: #{tpu_custom_call.1} parent=55 // pred_check
          %p601 = pneg %p265
        $region58: #{tpu_custom_call.1} parent=55 // pred_check_branch
          %603 = sbr.rel (%p601) target = $region60
        $region59: #{tpu_custom_call.1} parent=55 // pred_region
          %s605 = ssub.s32 64, 64
          %606 = vsyncadd %s597, %s605
          %s607 = sadd.s32 %s28, %s27
          %s608 = smul.addr %s607, 64
          %s609 = scalar_lea.hbm %s9, %s608
          %s611 = sshll.u32 %s600, 4
          %s612 = int_to_ptr.vmem [resolvable:$true] %s611
          %614 = dma.vmem_to_hbm [thread:$0]  %s612, 64, %s609, %s597
        $region60: #{tpu_custom_call.1} parent=55 // pred_fallthru
          _
      $region56: #{tpu_custom_call.1} parent=5 // pred_fallthru
        _
      %p615 = scmp.le.s32.totalorder 2, %s18
      // Predicated region
      $region61: #{tpu_custom_call.1} parent=5 // pred_check
        %p616 = pneg %p615
      $region62: #{tpu_custom_call.1} parent=5 // pred_check_branch
        %618 = sbr.rel (%p616) target = $region64
      $region63: #{tpu_custom_call.1} parent=5 // pred_region
        %s619 = ssub.s32 %s18, 2
        // Predicated region
        $region65: #{tpu_custom_call.1} parent=63 // pred_check
          %p620 = pneg %p271
        $region66: #{tpu_custom_call.1} parent=63 // pred_check_branch
          %622 = sbr.rel (%p620) target = $region68
        $region67: #{tpu_custom_call.1} parent=63 // pred_region
          %s623 = sand.u32 %s256, 1
          %s624 = scalar_lea.sflag [#allocation4], %s623
          %s625 = sand.u32 %s256, 1
          %s626 = smul.addr %s625, 4
          %s627 = scalar_lea.vmem [#allocation3], %s626
          %628 = dma.done %s624, 64
        $region68: #{tpu_custom_call.1} parent=63 // pred_fallthru
          _
      $region64: #{tpu_custom_call.1} parent=5 // pred_fallthru
        _
    $region6: #{tpu_custom_call.1} parent=1 // loop_footer
      %s22 = sadd.s32 1, %s18
    $region7: #{tpu_custom_call.1} parent=1 // loop_footer_branch
      %17 = sbr.rel target = $region3
    $region8: #{tpu_custom_call.1} parent=1 // loop_exit
      _
    %629 = vsyncpa [#allocation4], 1
    %s630 = scalar_lea.sflag [#allocation4], 1
    %631 = vsyncpa %s630, 1

</llo_original>
